<compile_context>
chip_gen: v5e
topology: v5e:2x2
jax: 0.10.0
libtpu: 0.0.40
codegen_flags: <defaults>
</compile_context>

<pallas_src>
import functools

import jax
import jax.numpy as jnp
from jax.experimental import pallas as pl
from jax.experimental.pallas import tpu as pltpu


def _round_up(x, m):
    return ((x + m - 1) // m) * m


def _masked_tile(x_ref, s, *, hw, tile, mask_tail):
    """Load one (Cin, ts) spatial tile, zeroing columns past the true extent."""
    x_t = x_ref[0]                                    # (Cin, ts)
    if mask_tail:
        col = jax.lax.broadcasted_iota(jnp.int32, (1, tile), 1)
        valid = (s * tile + col) < hw
        x_t = jnp.where(valid, x_t, jnp.zeros_like(x_t))
    return x_t


def _proj_relu_pool(x_t, w_ref, tile):
    """1x1-conv stand-in + ReLU + lane-dense partial spatial sum -> (1, Cf)."""
    proj_t = jnp.dot(w_ref[...], x_t, preferred_element_type=jnp.float32)
    r = jnp.maximum(proj_t, 0.0)                      # (Cf, ts)
    ones = jnp.ones((1, tile), jnp.float32)
    return jax.lax.dot_general(ones, r, (((1,), (1,)), ((), ())),
                               preferred_element_type=jnp.float32)  # (1, Cf)


# ---------------------------------------------------------------------------
# Kernel 1 (training): fused base stand-in + global average pool.
#   grid = (N, spatial_tiles); spatial axis is a reduction ("arbitrary").
# ---------------------------------------------------------------------------
def base_pool_kernel(x_ref, w_ref, gf_ref, *, hw, tile, mask_tail):
    s = pl.program_id(1)

    @pl.when(s == 0)
    def _init():
        gf_ref[...] = jnp.zeros_like(gf_ref)

    x_t = _masked_tile(x_ref, s, hw=hw, tile=tile, mask_tail=mask_tail)
    gf_ref[...] = gf_ref[...] + _proj_relu_pool(x_t, w_ref, tile)

    @pl.when(s == pl.num_programs(1) - 1)
    def _finalize():
        gf_ref[...] = gf_ref[...] * (1.0 / hw)


# ---------------------------------------------------------------------------
# Kernel 1' (eval): base stand-in + pool + BatchNorm1d(running stats), fused.
#   Output is the final `feat` directly — no second kernel launch in eval.
# ---------------------------------------------------------------------------
def base_pool_bn_kernel(x_ref, w_ref, gamma_ref, beta_ref, rmean_ref, rvar_ref,
                        feat_ref, *, hw, tile, mask_tail, eps):
    s = pl.program_id(1)

    @pl.when(s == 0)
    def _init():
        feat_ref[...] = jnp.zeros_like(feat_ref)

    x_t = _masked_tile(x_ref, s, hw=hw, tile=tile, mask_tail=mask_tail)
    feat_ref[...] = feat_ref[...] + _proj_relu_pool(x_t, w_ref, tile)

    @pl.when(s == pl.num_programs(1) - 1)
    def _finalize():
        gf = feat_ref[...] * (1.0 / hw)                       # (1, 1, Cf)
        inv = jax.lax.rsqrt(rvar_ref[...] + eps)              # (1, Cf)
        feat_ref[...] = (gf - rmean_ref[...]) * inv * gamma_ref[...] \
            + beta_ref[...]


# ---------------------------------------------------------------------------
# Kernel 2 (training head): BatchNorm1d (batch stats) + bias-free Linear.
# ---------------------------------------------------------------------------
def head_train_kernel(gf_ref, gamma_ref, beta_ref, wcls_ref, cls_ref, *, eps):
    gf = gf_ref[...]                                              # (N, Cf)
    mu = jnp.mean(gf, axis=0, keepdims=True)                      # (1, Cf)
    var = jnp.mean(jnp.square(gf - mu), axis=0, keepdims=True)    # biased var
    inv = jax.lax.rsqrt(var + eps)
    feat = (gf - mu) * inv * gamma_ref[...] + beta_ref[...]
    cls_ref[...] = jnp.dot(feat, wcls_ref[...],
                           preferred_element_type=jnp.float32)    # (N, NCpad)


# ---------------------------------------------------------------------------
# Params / wrapper
# ---------------------------------------------------------------------------
def init_params(key, c_in, in_planes, num_classes):
    k_base, k_cls, k_rm, k_rv = jax.random.split(key, 4)
    # kaiming(fan_in)-style init for the 1x1-conv stand-in, PyTorch (out, in)
    w_base = jax.random.normal(k_base, (in_planes, c_in), jnp.float32) * \
        jnp.sqrt(2.0 / c_in)
    # weights_init_kaiming on BatchNorm1d: weight=1, bias=0
    gamma = jnp.ones((1, in_planes), jnp.float32)
    beta = jnp.zeros((1, in_planes), jnp.float32)
    # non-trivial running stats so the eval BN math is actually exercised
    running_mean = 0.1 * jax.random.normal(k_rm, (1, in_planes), jnp.float32)
    running_var = 1.0 + 0.2 * jax.random.uniform(k_rv, (1, in_planes),
                                                 jnp.float32)
    # weights_init_classifier: normal(std=0.001), no bias
    w_cls = jax.random.normal(k_cls, (in_planes, num_classes),
                              jnp.float32) * 0.001
    return dict(w_base=w_base, gamma=gamma, beta=beta,
                running_mean=running_mean, running_var=running_var,
                w_cls=w_cls)


def backbone_forward(x_nchw, params, *, training=False, eps=1e-5,
                     spatial_tile=2048, update_bn_stats=False,
                     bn_momentum=0.1):
    N, Cin, H, W = x_nchw.shape
    Cf = params["w_base"].shape[0]
    num_classes = params["w_cls"].shape[1]
    HW = H * W

    # NCHW -> (N, Cin, H*W): contiguous-trailing-dim reshape, no transpose op.
    x3 = x_nchw.reshape(N, Cin, HW)

    ts = min(spatial_tile, _round_up(HW, 128))     # spatial tile (lane axis)
    n_s = pl.cdiv(HW, ts)
    mask_tail = (HW % ts) != 0

    cparams = pltpu.CompilerParams(
        dimension_semantics=("parallel", "arbitrary"),
        vmem_limit_bytes=48 * 1024 * 1024)
    x_spec = pl.BlockSpec((1, Cin, ts), lambda n, s: (n, 0, s))
    w_spec = pl.BlockSpec((Cf, Cin), lambda n, s: (0, 0))
    vec_spec = pl.BlockSpec((1, Cf), lambda n, s: (0, 0))
    out3_spec = pl.BlockSpec((1, 1, Cf), lambda n, s: (n, 0, 0))

    if not training:
        # ---- eval: everything fused into a single kernel -> feat directly --
        feat3 = pl.pallas_call(
            functools.partial(base_pool_bn_kernel, hw=HW, tile=ts,
                              mask_tail=mask_tail, eps=eps),
            out_shape=jax.ShapeDtypeStruct((N, 1, Cf), jnp.float32),
            grid=(N, n_s),
            in_specs=[x_spec, w_spec, vec_spec, vec_spec, vec_spec, vec_spec],
            out_specs=out3_spec,
            compiler_params=cparams,
        )(x3, params["w_base"], params["gamma"], params["beta"],
          params["running_mean"], params["running_var"])
        return feat3.reshape(N, Cf)

    # ---- training: base+pool kernel, then BN(batch stats)+classifier ------
    gf3 = pl.pallas_call(
        functools.partial(base_pool_kernel, hw=HW, tile=ts,
                          mask_tail=mask_tail),
        out_shape=jax.ShapeDtypeStruct((N, 1, Cf), jnp.float32),
        grid=(N, n_s),
        in_specs=[x_spec, w_spec],
        out_specs=out3_spec,
        compiler_params=cparams,
    )(x3, params["w_base"])
    gf = gf3.reshape(N, Cf)                         # global_feat

    # pad classifier columns to a multiple of 128 for lane-dense stores
    ncp = _round_up(num_classes, 128)
    w_cls_p = params["w_cls"]
    if ncp != num_classes:
        w_cls_p = jnp.pad(w_cls_p, ((0, 0), (0, ncp - num_classes)))
    cls_p = pl.pallas_call(
        functools.partial(head_train_kernel, eps=eps),
        out_shape=jax.ShapeDtypeStruct((N, ncp), jnp.float32),
    )(gf, params["gamma"], params["beta"], w_cls_p)
    cls = cls_p[:, :num_classes]

    if update_bn_stats:
        # functional equivalent of PyTorch BatchNorm1d's running-stat update
        # (unbiased batch variance, momentum 0.1 by default)
        mu = jnp.mean(gf, axis=0, keepdims=True)
        var_b = jnp.mean(jnp.square(gf - mu), axis=0, keepdims=True)
        var_u = var_b * (N / max(N - 1, 1))
        new_rm = (1.0 - bn_momentum) * params["running_mean"] + \
            bn_momentum * mu
        new_rv = (1.0 - bn_momentum) * params["running_var"] + \
            bn_momentum * var_u
        return cls, gf, (new_rm, new_rv)
    return cls, gf            # (cls_score, global_feat) as in Backbone.forward


# ---------------------------------------------------------------------------
# Pure-JAX reference for sanity checks
# ---------------------------------------------------------------------------
def backbone_ref(x_nchw, params, *, training=False, eps=1e-5):
    N, Cin, H, W = x_nchw.shape
    x3 = x_nchw.reshape(N, Cin, H * W)
    fm = jnp.maximum(jnp.einsum('fc,nct->nft', params["w_base"], x3), 0.0)
    gf = jnp.mean(fm, axis=2)                       # (N, Cf)
    if training:
        mu = jnp.mean(gf, axis=0, keepdims=True)
        var = jnp.mean((gf - mu) ** 2, axis=0, keepdims=True)
    else:
        mu, var = params["running_mean"], params["running_var"]
    feat = (gf - mu) * jax.lax.rsqrt(var + eps) * params["gamma"] + \
        params["beta"]
    cls = feat @ params["w_cls"]
    return (cls, gf) if training else feat


if __name__ == "__main__":
    key = jax.random.PRNGKey(0)
    k_x1, k_p1, k_x2, k_p2 = jax.random.split(key, 4)

    # -------- Case 1: divisible spatial extent (single 256-wide tile) -------
    N, Cin, H, W = 2, 4, 16, 16
    in_planes, num_classes = 128, 16
    x = jax.random.normal(k_x1, (N, Cin, H, W), jnp.float32)
    params = init_params(k_p1, Cin, in_planes, num_classes)

    feat = backbone_forward(x, params, training=False)
    jax.block_until_ready(feat)
    feat_ref = backbone_ref(x, params, training=False)
    assert feat.shape == (N, in_planes)
    assert jnp.allclose(feat, feat_ref, atol=1e-4, rtol=1e-4)

    cls, gf = backbone_forward(x, params, training=True)
    jax.block_until_ready((cls, gf))
    cls_ref, gf_ref = backbone_ref(x, params, training=True)
    assert cls.shape == (N, num_classes) and gf.shape == (N, in_planes)
    assert jnp.allclose(gf, gf_ref, atol=1e-4, rtol=1e-4)
    assert jnp.allclose(cls, cls_ref, atol=1e-4, rtol=1e-4)

    # optional functional BN running-stat update (PyTorch side effect)
    cls2, gf2, (nrm, nrv) = backbone_forward(x, params, training=True,
                                             update_bn_stats=True)
    jax.block_until_ready((cls2, gf2, nrm, nrv))
    assert nrm.shape == (1, in_planes) and nrv.shape == (1, in_planes)
    assert bool(jnp.all(jnp.isfinite(nrm))) and bool(jnp.all(jnp.isfinite(nrv)))

    # -------- Case 2: ragged spatial extent (240 = 128 + 112, masked tail) --
    N2, Cin2, H2, W2 = 3, 3, 12, 20
    x2 = jax.random.normal(k_x2, (N2, Cin2, H2, W2), jnp.float32)
    params2 = init_params(k_p2, Cin2, in_planes, num_classes)

    feat2 = backbone_forward(x2, params2, training=False, spatial_tile=128)
    jax.block_until_ready(feat2)
    feat2_ref = backbone_ref(x2, params2, training=False)
    assert jnp.allclose(feat2, feat2_ref, atol=1e-4, rtol=1e-4)

    cls2b, gf2b = backbone_forward(x2, params2, training=True,
                                   spatial_tile=128)
    jax.block_until_ready((cls2b, gf2b))
    cls2_ref, gf2_ref = backbone_ref(x2, params2, training=True)
    assert jnp.allclose(gf2b, gf2_ref, atol=1e-4, rtol=1e-4)
    assert jnp.allclose(cls2b, cls2_ref, atol=1e-4, rtol=1e-4)

    print("KERNEL_OK")
</pallas_src>

<mosaic_0001>
module attributes {stable_mosaic.version = 11 : i64} {
  func.func @base_pool_bn_kernel(%arg0: i32, %arg1: i32, %arg2: memref<1x4x256xf32, #tpu.memory_space<vmem>>, %arg3: memref<128x4xf32, #tpu.memory_space<vmem>>, %arg4: memref<1x128xf32, #tpu.memory_space<vmem>>, %arg5: memref<1x128xf32, #tpu.memory_space<vmem>>, %arg6: memref<1x128xf32, #tpu.memory_space<vmem>>, %arg7: memref<1x128xf32, #tpu.memory_space<vmem>>, %arg8: memref<1x1x128xf32, #tpu.memory_space<vmem>>) attributes {dimension_semantics = [#tpu.dimension_semantics<parallel>, #tpu.dimension_semantics<arbitrary>], iteration_bounds = array<i64: 2, 1>, scalar_prefetch = 0 : i64, scratch_operands = 0 : i64, tpu.core_type = #tpu.core_type<tc>, window_params = [{transform_indices = @transform_0, window_bounds = array<i64: 1, 4, 256>}, {pipeline_mode = #tpu.pipeline_mode<synchronous>, transform_indices = @transform_1, window_bounds = array<i64: 128, 4>}, {pipeline_mode = #tpu.pipeline_mode<synchronous>, transform_indices = @transform_2, window_bounds = array<i64: 1, 128>}, {pipeline_mode = #tpu.pipeline_mode<synchronous>, transform_indices = @transform_3, window_bounds = array<i64: 1, 128>}, {pipeline_mode = #tpu.pipeline_mode<synchronous>, transform_indices = @transform_4, window_bounds = array<i64: 1, 128>}, {pipeline_mode = #tpu.pipeline_mode<synchronous>, transform_indices = @transform_5, window_bounds = array<i64: 1, 128>}, {transform_indices = @transform_6, window_bounds = array<i64: 1, 1, 128>}]} {
    %c0_i32 = arith.constant 0 : i32
    %0 = arith.cmpi eq, %arg1, %c0_i32 : i32
    %1 = arith.extui %0 : i1 to i32
    %c0_i32_0 = arith.constant 0 : i32
    %2 = arith.cmpi ne, %1, %c0_i32_0 : i32
    scf.if %2 {
      %cst_16 = arith.constant 0.000000e+00 : f32
      %18 = vector.broadcast %cst_16 : f32 to vector<1x1x128xf32>
      %c0_17 = arith.constant 0 : index
      %c0_18 = arith.constant 0 : index
      %c0_19 = arith.constant 0 : index
      %19 = vector.load %arg8[%c0_17, %c0_18, %c0_19] : memref<1x1x128xf32, #tpu.memory_space<vmem>>, vector<1x1x128xf32>
      tpu.vector_store %arg8[%c0_17, %c0_18, %c0_19], %18 {strides = array<i32>} : memref<1x1x128xf32, #tpu.memory_space<vmem>>, vector<1x1x128xf32>,
    } else {
    }
    %c0 = arith.constant 0 : index
    %c0_1 = arith.constant 0 : index
    %c0_2 = arith.constant 0 : index
    %3 = vector.load %arg2[%c0, %c0_1, %c0_2] : memref<1x4x256xf32, #tpu.memory_space<vmem>>, vector<1x4x256xf32>
    %4 = vector.shape_cast %3 : vector<1x4x256xf32> to vector<4x256xf32>
    %c0_3 = arith.constant 0 : index
    %c0_4 = arith.constant 0 : index
    %c0_5 = arith.constant 0 : index
    %5 = vector.load %arg8[%c0_3, %c0_4, %c0_5] : memref<1x1x128xf32, #tpu.memory_space<vmem>>, vector<1x1x128xf32>
    %c0_6 = arith.constant 0 : index
    %c0_7 = arith.constant 0 : index
    %6 = vector.load %arg3[%c0_6, %c0_7] : memref<128x4xf32, #tpu.memory_space<vmem>>, vector<128x4xf32>
    %cst = arith.constant dense<0.000000e+00> : vector<128x256xf32>
    %7 = tpu.matmul %6, %4, %cst {dimension_numbers = #tpu.dot_dimension_numbers<[1], [0], [0], [1], [0, 0, 1, 1], [], []>} : vector<128x4xf32>, vector<4x256xf32>, vector<128x256xf32> -> vector<128x256xf32>
    %cst_8 = arith.constant 0.000000e+00 : f32
    %8 = vector.broadcast %cst_8 : f32 to vector<128x256xf32>
    %9 = arith.maximumf %7, %8 : vector<128x256xf32>
    %cst_9 = arith.constant 1.000000e+00 : f32
    %10 = vector.broadcast %cst_9 : f32 to vector<1x256xf32>
    %cst_10 = arith.constant dense<0.000000e+00> : vector<1x128xf32>
    %11 = tpu.matmul %10, %9, %cst_10 {dimension_numbers = #tpu.dot_dimension_numbers<[1], [1], [0], [0], [0, 0, 1, 0], [], []>} : vector<1x256xf32>, vector<128x256xf32>, vector<1x128xf32> -> vector<1x128xf32>
    %12 = vector.shape_cast %11 : vector<1x128xf32> to vector<1x1x128xf32>
    %13 = arith.addf %5, %12 : vector<1x1x128xf32>
    %c0_11 = arith.constant 0 : index
    %c0_12 = arith.constant 0 : index
    %c0_13 = arith.constant 0 : index
    %14 = vector.load %arg8[%c0_11, %c0_12, %c0_13] : memref<1x1x128xf32, #tpu.memory_space<vmem>>, vector<1x1x128xf32>
    tpu.vector_store %arg8[%c0_11, %c0_12, %c0_13], %13 {strides = array<i32>} : memref<1x1x128xf32, #tpu.memory_space<vmem>>, vector<1x1x128xf32>,
    %c0_i32_14 = arith.constant 0 : i32
    %15 = arith.cmpi eq, %arg1, %c0_i32_14 : i32
    %16 = arith.extui %15 : i1 to i32
    %c0_i32_15 = arith.constant 0 : i32
    %17 = arith.cmpi ne, %16, %c0_i32_15 : i32
    scf.if %17 {
      %c0_16 = arith.constant 0 : index
      %c0_17 = arith.constant 0 : index
      %c0_18 = arith.constant 0 : index
      %18 = vector.load %arg8[%c0_16, %c0_17, %c0_18] : memref<1x1x128xf32, #tpu.memory_space<vmem>>, vector<1x1x128xf32>
      %cst_19 = arith.constant 3.906250e-03 : f32
      %19 = vector.broadcast %cst_19 : f32 to vector<1x1x128xf32>
      %20 = arith.mulf %18, %19 : vector<1x1x128xf32>
      %c0_20 = arith.constant 0 : index
      %c0_21 = arith.constant 0 : index
      %21 = vector.load %arg7[%c0_20, %c0_21] : memref<1x128xf32, #tpu.memory_space<vmem>>, vector<1x128xf32>
      %cst_22 = arith.constant 9.99999974E-6 : f32
      %22 = vector.broadcast %cst_22 : f32 to vector<1x128xf32>
      %23 = arith.addf %21, %22 : vector<1x128xf32>
      %24 = math.rsqrt %23 : vector<1x128xf32>
      %c0_23 = arith.constant 0 : index
      %c0_24 = arith.constant 0 : index
      %25 = vector.load %arg6[%c0_23, %c0_24] : memref<1x128xf32, #tpu.memory_space<vmem>>, vector<1x128xf32>
      %26 = vector.shape_cast %25 : vector<1x128xf32> to vector<1x1x128xf32>
      %27 = arith.subf %20, %26 : vector<1x1x128xf32>
      %28 = vector.shape_cast %24 : vector<1x128xf32> to vector<1x1x128xf32>
      %29 = arith.mulf %27, %28 : vector<1x1x128xf32>
      %c0_25 = arith.constant 0 : index
      %c0_26 = arith.constant 0 : index
      %30 = vector.load %arg4[%c0_25, %c0_26] : memref<1x128xf32, #tpu.memory_space<vmem>>, vector<1x128xf32>
      %31 = vector.shape_cast %30 : vector<1x128xf32> to vector<1x1x128xf32>
      %32 = arith.mulf %29, %31 : vector<1x1x128xf32>
      %c0_27 = arith.constant 0 : index
      %c0_28 = arith.constant 0 : index
      %33 = vector.load %arg5[%c0_27, %c0_28] : memref<1x128xf32, #tpu.memory_space<vmem>>, vector<1x128xf32>
      %34 = vector.shape_cast %33 : vector<1x128xf32> to vector<1x1x128xf32>
      %35 = arith.addf %32, %34 : vector<1x1x128xf32>
      %c0_29 = arith.constant 0 : index
      %c0_30 = arith.constant 0 : index
      %c0_31 = arith.constant 0 : index
      %36 = vector.load %arg8[%c0_29, %c0_30, %c0_31] : memref<1x1x128xf32, #tpu.memory_space<vmem>>, vector<1x1x128xf32>
      tpu.vector_store %arg8[%c0_29, %c0_30, %c0_31], %35 {strides = array<i32>} : memref<1x1x128xf32, #tpu.memory_space<vmem>>, vector<1x1x128xf32>,
    } else {
    }
    return
  }
  func.func @transform_0(%arg0: i32, %arg1: i32) -> (i32, i32, i32) {
    %c0_i32 = arith.constant 0 : i32
    %c0_i32_0 = arith.constant 0 : i32
    return %arg0, %c0_i32, %arg1 : i32, i32, i32
  }
  func.func @transform_1(%arg0: i32, %arg1: i32) -> (i32, i32) {
    %c0_i32 = arith.constant 0 : i32
    %c0_i32_0 = arith.constant 0 : i32
    %c0_i32_1 = arith.constant 0 : i32
    return %c0_i32, %c0_i32_0 : i32, i32
  }
  func.func @transform_2(%arg0: i32, %arg1: i32) -> (i32, i32) {
    %c0_i32 = arith.constant 0 : i32
    %c0_i32_0 = arith.constant 0 : i32
    %c0_i32_1 = arith.constant 0 : i32
    return %c0_i32, %c0_i32_0 : i32, i32
  }
  func.func @transform_3(%arg0: i32, %arg1: i32) -> (i32, i32) {
    %c0_i32 = arith.constant 0 : i32
    %c0_i32_0 = arith.constant 0 : i32
    %c0_i32_1 = arith.constant 0 : i32
    return %c0_i32, %c0_i32_0 : i32, i32
  }
  func.func @transform_4(%arg0: i32, %arg1: i32) -> (i32, i32) {
    %c0_i32 = arith.constant 0 : i32
    %c0_i32_0 = arith.constant 0 : i32
    %c0_i32_1 = arith.constant 0 : i32
    return %c0_i32, %c0_i32_0 : i32, i32
  }
  func.func @transform_5(%arg0: i32, %arg1: i32) -> (i32, i32) {
    %c0_i32 = arith.constant 0 : i32
    %c0_i32_0 = arith.constant 0 : i32
    %c0_i32_1 = arith.constant 0 : i32
    return %c0_i32, %c0_i32_0 : i32, i32
  }
  func.func @transform_6(%arg0: i32, %arg1: i32) -> (i32, i32, i32) {
    %c0_i32 = arith.constant 0 : i32
    %c0_i32_0 = arith.constant 0 : i32
    %c0_i32_1 = arith.constant 0 : i32
    return %arg0, %c0_i32, %c0_i32_0 : i32, i32, i32
  }
}

</mosaic_0001>

<llo_original>
// kernel: tpu_custom_call.1
$region0: #{tpu_custom_call.1}
  #allocation0 [shape = 'u32[]', space=smem, size = 0x4, offset = 0x4, fixed_abs, tag = 'smem constant byte address 0x4 - core index']
  #allocation1 [shape = 'u32[72,128]{1,0:T(1,128)}', space=vmem, size = 0x9000, scoped, tag = 'internal scratch']
  %s0 = inlined_call_operand.vmem [shape: f32[2,4,256], index: 0, kind: input, shape index: {}]
  %s1 = inlined_call_operand.vmem [shape: f32[128,4], index: 1, kind: input, shape index: {}]
  %s2 = inlined_call_operand.vmem [shape: f32[1,128], index: 2, kind: input, shape index: {}]
  %s3 = inlined_call_operand.vmem [shape: f32[1,128], index: 3, kind: input, shape index: {}]
  %s4 = inlined_call_operand.vmem [shape: f32[1,128], index: 4, kind: input, shape index: {}]
  %s5 = inlined_call_operand.vmem [shape: f32[1,128], index: 5, kind: input, shape index: {}]
  %s6 = inlined_call_operand.hbm [shape: f32[2,1,128], index: 6, kind: output, shape index: {}]
  %s7 = sld [smem:[#allocation0]]
  $region65: #{tpu_custom_call.1} parent=0
    _
  %s9 = ssub.s32 1, %s7
  %s10 = scalar_select 0, %s9, %s7
  $region1: #{tpu_custom_call.1} parent=0
    #allocation2 [shape = 'u8[1024]{0}', space=vmem, size = 0x400, scoped, tag = 'output window, operand 0']
    #allocation3 [shape = 's32[2]{0}', space=sflag, size = 0x8, scoped, tag = 'scoped memory for tpu_custom_call.1']
    %11 = vsyncpa [#allocation3], 0
    %s12 = scalar_lea.sflag [#allocation3], 1
    %13 = vsyncpa %s12, 0
    loop: start=0, step=1, limit=4
    $region2: #{tpu_custom_call.1} parent=1 // loop_pre_header
      _
    $region3: #{tpu_custom_call.1} parent=1 // loop_header
      %s15 = sphi 0, %s19
      %p16 = scmp.ge.s32.totalorder %s15, 4
      %s22 = sphi 0, %s34
      %s23 = sphi 0, %s30
      %s24 = sphi 0, %s22
      %s25 = sphi 0, %s23
      %s26 = sphi 0, %s24
      %s27 = sphi 0, %s25
      %s39 = sphi 0, %s41
      %s42 = sphi 0, %s39
      %s43 = sphi 0, %s42
      %s59 = sphi 0, %s43
      %s63 = sphi 0, %s63
      %s65 = sphi 0, %s63
      %s66 = sphi 0, %s65
      %s80 = sphi 0, %s66
      %s84 = sphi 0, %s84
      %s86 = sphi 0, %s84
      %s87 = sphi 0, %s86
      %s101 = sphi 0, %s87
      %s105 = sphi 0, %s105
      %s107 = sphi 0, %s105
      %s108 = sphi 0, %s107
      %s122 = sphi 0, %s108
      %s126 = sphi 0, %s126
      %s128 = sphi 0, %s126
      %s129 = sphi 0, %s128
      %s143 = sphi 0, %s129
      %s147 = sphi 0, %s147
      %s149 = sphi 0, %s147
      %s150 = sphi 0, %s149
      %s164 = sphi 0, %s150
      %s170 = sphi 0, %s172
      %s173 = sphi 0, %s170
      %s174 = sphi 0, %s173
      %s190 = sphi 0, %s174
    $region4: #{tpu_custom_call.1} parent=1 // loop_header_branch
      %18 = sbr.rel (%p16) target = $region8
    $region5: #{tpu_custom_call.1} parent=1 // loop_body
      %s20 = ssub.s32 %s15, 1
      %s21 = ssub.s32 %s15, 2
      %s28 = sadd.s32 1, %s23
      %p29 = scmp.ge.s32.totalorder %s28, 1
      %s30 = scalar_select %p29, 0, %s28
      %s31 = sadd.s32 1, %s22
      %s32 = scalar_select %p29, %s31, %s22
      %p33 = scmp.ge.s32.totalorder %s32, 2
      %s34 = scalar_select %p33, 0, %s32
      %s35 = ssub.s32 %s22, %s34
      %s36 = ssub.s32 %s23, %s30
      %s37 = sor.u32 %s35, %s36
      %p38 = scmp.eq.s32.totalorder %s37, 0
      %s40 = sadd.s32 %s39, 1
      %s41 = scalar_select %p38, %s39, %s40
      %p44 = pneg %p38
      %p45 = scmp.eq.s32.totalorder %s15, 1
      %p46 = por %p44, %p45
      %p47 = scmp.ne.s32.totalorder %s39, %s42
      %p48 = scmp.eq.s32.totalorder %s15, 0
      %p49 = por %p47, %p48
      %p50 = scmp.ne.s32.totalorder %s39, %s42
      %p51 = scmp.eq.s32.totalorder %s20, 1
      %p52 = por %p50, %p51
      %p53 = scmp.ne.s32.totalorder %s42, %s43
      %p54 = scmp.eq.s32.totalorder %s20, 0
      %p55 = por %p53, %p54
      %p56 = scmp.ne.s32.totalorder %s42, %s43
      %p57 = scmp.eq.s32.totalorder %s21, 1
      %p58 = por %p56, %p57
      %p60 = scmp.ne.s32.totalorder %s43, %s59
      %p61 = scmp.eq.s32.totalorder %s21, 0
      %p62 = por %p60, %p61
      %s64 = sadd.s32 %s63, 1
      %p67 = scmp.eq.s32.totalorder %s15, 1
      %p68 = scmp.ne.s32.totalorder %s63, %s65
      %p69 = scmp.eq.s32.totalorder %s15, 0
      %p70 = por %p68, %p69
      %p71 = scmp.ne.s32.totalorder %s63, %s65
      %p72 = scmp.eq.s32.totalorder %s20, 1
      %p73 = por %p71, %p72
      %p74 = scmp.ne.s32.totalorder %s65, %s66
      %p75 = scmp.eq.s32.totalorder %s20, 0
      %p76 = por %p74, %p75
      %p77 = scmp.ne.s32.totalorder %s65, %s66
      %p78 = scmp.eq.s32.totalorder %s21, 1
      %p79 = por %p77, %p78
      %p81 = scmp.ne.s32.totalorder %s66, %s80
      %p82 = scmp.eq.s32.totalorder %s21, 0
      %p83 = por %p81, %p82
      %s85 = sadd.s32 %s84, 1
      %p88 = scmp.eq.s32.totalorder %s15, 1
      %p89 = scmp.ne.s32.totalorder %s84, %s86
      %p90 = scmp.eq.s32.totalorder %s15, 0
      %p91 = por %p89, %p90
      %p92 = scmp.ne.s32.totalorder %s84, %s86
      %p93 = scmp.eq.s32.totalorder %s20, 1
      %p94 = por %p92, %p93
      %p95 = scmp.ne.s32.totalorder %s86, %s87
      %p96 = scmp.eq.s32.totalorder %s20, 0
      %p97 = por %p95, %p96
      %p98 = scmp.ne.s32.totalorder %s86, %s87
      %p99 = scmp.eq.s32.totalorder %s21, 1
      %p100 = por %p98, %p99
      %p102 = scmp.ne.s32.totalorder %s87, %s101
      %p103 = scmp.eq.s32.totalorder %s21, 0
      %p104 = por %p102, %p103
      %s106 = sadd.s32 %s105, 1
      %p109 = scmp.eq.s32.totalorder %s15, 1
      %p110 = scmp.ne.s32.totalorder %s105, %s107
      %p111 = scmp.eq.s32.totalorder %s15, 0
      %p112 = por %p110, %p111
      %p113 = scmp.ne.s32.totalorder %s105, %s107
      %p114 = scmp.eq.s32.totalorder %s20, 1
      %p115 = por %p113, %p114
      %p116 = scmp.ne.s32.totalorder %s107, %s108
      %p117 = scmp.eq.s32.totalorder %s20, 0
      %p118 = por %p116, %p117
      %p119 = scmp.ne.s32.totalorder %s107, %s108
      %p120 = scmp.eq.s32.totalorder %s21, 1
      %p121 = por %p119, %p120
      %p123 = scmp.ne.s32.totalorder %s108, %s122
      %p124 = scmp.eq.s32.totalorder %s21, 0
      %p125 = por %p123, %p124
      %s127 = sadd.s32 %s126, 1
      %p130 = scmp.eq.s32.totalorder %s15, 1
      %p131 = scmp.ne.s32.totalorder %s126, %s128
      %p132 = scmp.eq.s32.totalorder %s15, 0
      %p133 = por %p131, %p132
      %p134 = scmp.ne.s32.totalorder %s126, %s128
      %p135 = scmp.eq.s32.totalorder %s20, 1
      %p136 = por %p134, %p135
      %p137 = scmp.ne.s32.totalorder %s128, %s129
      %p138 = scmp.eq.s32.totalorder %s20, 0
      %p139 = por %p137, %p138
      %p140 = scmp.ne.s32.totalorder %s128, %s129
      %p141 = scmp.eq.s32.totalorder %s21, 1
      %p142 = por %p140, %p141
      %p144 = scmp.ne.s32.totalorder %s129, %s143
      %p145 = scmp.eq.s32.totalorder %s21, 0
      %p146 = por %p144, %p145
      %s148 = sadd.s32 %s147, 1
      %p151 = scmp.eq.s32.totalorder %s15, 1
      %p152 = scmp.ne.s32.totalorder %s147, %s149
      %p153 = scmp.eq.s32.totalorder %s15, 0
      %p154 = por %p152, %p153
      %p155 = scmp.ne.s32.totalorder %s147, %s149
      %p156 = scmp.eq.s32.totalorder %s20, 1
      %p157 = por %p155, %p156
      %p158 = scmp.ne.s32.totalorder %s149, %s150
      %p159 = scmp.eq.s32.totalorder %s20, 0
      %p160 = por %p158, %p159
      %p161 = scmp.ne.s32.totalorder %s149, %s150
      %p162 = scmp.eq.s32.totalorder %s21, 1
      %p163 = por %p161, %p162
      %p165 = scmp.ne.s32.totalorder %s150, %s164
      %p166 = scmp.eq.s32.totalorder %s21, 0
      %p167 = por %p165, %p166
      %s168 = ssub.s32 %s22, %s34
      %p169 = scmp.eq.s32.totalorder %s168, 0
      %s171 = sadd.s32 %s170, 1
      %s172 = scalar_select %p169, %s170, %s171
      %p175 = pneg %p169
      %p176 = scmp.eq.s32.totalorder %s15, 1
      %p177 = por %p175, %p176
      %p178 = scmp.ne.s32.totalorder %s170, %s173
      %p179 = scmp.eq.s32.totalorder %s15, 0
      %p180 = por %p178, %p179
      %p181 = scmp.ne.s32.totalorder %s170, %s173
      %p182 = scmp.eq.s32.totalorder %s20, 1
      %p183 = por %p181, %p182
      %p184 = scmp.ne.s32.totalorder %s173, %s174
      %p185 = scmp.eq.s32.totalorder %s20, 0
      %p186 = por %p184, %p185
      %p187 = scmp.ne.s32.totalorder %s173, %s174
      %p188 = scmp.eq.s32.totalorder %s21, 1
      %p189 = por %p187, %p188
      %p191 = scmp.ne.s32.totalorder %s174, %s190
      %p192 = scmp.eq.s32.totalorder %s21, 0
      %p193 = por %p191, %p192
      %p194 = scmp.le.s32.totalorder 1, %s15
      %p195 = scmp.lt.s32.totalorder %s15, 3
      %p196 = pnand %p194, %p195
      %p197 = pneg %p196
      // Predicated region
      $region9: #{tpu_custom_call.1} parent=5 // pred_check
        _
      $region10: #{tpu_custom_call.1} parent=5 // pred_check_branch
        %199 = sbr.rel (%p196) target = $region12
      $region11: #{tpu_custom_call.1} parent=5 // pred_region
        %s200 = ssub.s32 %s15, 1
        // Predicated region
        $region13: #{tpu_custom_call.1} parent=11 // pred_check
          %p201 = pneg %p76
        $region14: #{tpu_custom_call.1} parent=11 // pred_check_branch
          %203 = sbr.rel (%p201) target = $region16
        $region15: #{tpu_custom_call.1} parent=11 // pred_region
          _
        $region16: #{tpu_custom_call.1} parent=11 // pred_fallthru
          _
        // Predicated region
        $region17: #{tpu_custom_call.1} parent=11 // pred_check
          %p204 = pneg %p97
        $region18: #{tpu_custom_call.1} parent=11 // pred_check_branch
          %206 = sbr.rel (%p204) target = $region20
        $region19: #{tpu_custom_call.1} parent=11 // pred_region
          _
        $region20: #{tpu_custom_call.1} parent=11 // pred_fallthru
          _
        // Predicated region
        $region21: #{tpu_custom_call.1} parent=11 // pred_check
          %p207 = pneg %p118
        $region22: #{tpu_custom_call.1} parent=11 // pred_check_branch
          %209 = sbr.rel (%p207) target = $region24
        $region23: #{tpu_custom_call.1} parent=11 // pred_region
          _
        $region24: #{tpu_custom_call.1} parent=11 // pred_fallthru
          _
        // Predicated region
        $region25: #{tpu_custom_call.1} parent=11 // pred_check
          %p210 = pneg %p139
        $region26: #{tpu_custom_call.1} parent=11 // pred_check_branch
          %212 = sbr.rel (%p210) target = $region28
        $region27: #{tpu_custom_call.1} parent=11 // pred_region
          _
        $region28: #{tpu_custom_call.1} parent=11 // pred_fallthru
          _
        // Predicated region
        $region29: #{tpu_custom_call.1} parent=11 // pred_check
          %p213 = pneg %p160
        $region30: #{tpu_custom_call.1} parent=11 // pred_check_branch
          %215 = sbr.rel (%p213) target = $region32
        $region31: #{tpu_custom_call.1} parent=11 // pred_region
          _
        $region32: #{tpu_custom_call.1} parent=11 // pred_fallthru
          _
      $region12: #{tpu_custom_call.1} parent=5 // pred_fallthru
        _
      %p216 = scmp.lt.s32.totalorder %s15, 2
      // Predicated region
      $region33: #{tpu_custom_call.1} parent=5 // pred_check
        %p217 = pneg %p216
      $region34: #{tpu_custom_call.1} parent=5 // pred_check_branch
        %219 = sbr.rel (%p217) target = $region36
      $region35: #{tpu_custom_call.1} parent=5 // pred_region
        // Predicated region
        $region37: #{tpu_custom_call.1} parent=35 // pred_check
          %p220 = pneg %p49
        $region38: #{tpu_custom_call.1} parent=35 // pred_check_branch
          %222 = sbr.rel (%p220) target = $region40
        $region39: #{tpu_custom_call.1} parent=35 // pred_region
          %s223 = smul.u32 2, %s23
          %p224 = scmp.lt.s32.totalorder %s22, 1
          %s225 = scalar_select %p224, %s22, 1
          %p226 = scmp.lt.s32.totalorder %s223, 1
          %s227 = scalar_select %p226, %s223, 1
          %s228 = smul.addr %s225, 2
          %s229 = sadd.s32 %s227, %s228
          %s230 = smul.addr %s229, 4
          %s231 = scalar_lea.vmem %s0, %s230
          %s232 = smul.u32 2, %s23
        $region40: #{tpu_custom_call.1} parent=35 // pred_fallthru
          _
      $region36: #{tpu_custom_call.1} parent=5 // pred_fallthru
        _
      %p233 = scmp.le.s32.totalorder 1, %s15
      %p234 = scmp.lt.s32.totalorder %s15, 3
      %p235 = pnand %p233, %p234
      %p236 = pneg %p235
      // Predicated region
      $region41: #{tpu_custom_call.1} parent=5 // pred_check
        _
      $region42: #{tpu_custom_call.1} parent=5 // pred_check_branch
        %238 = sbr.rel (%p235) target = $region44
      $region43: #{tpu_custom_call.1} parent=5 // pred_region
        %s239 = ssub.s32 %s15, 1
        %s240 = smul.u32 2, %s25
        %p241 = scmp.lt.s32.totalorder %s24, 1
        %s242 = scalar_select %p241, %s24, 1
        %p243 = scmp.lt.s32.totalorder %s240, 1
        %s244 = scalar_select %p243, %s240, 1
        %s245 = smul.addr %s242, 2
        %s246 = sadd.s32 %s244, %s245
        %s247 = smul.addr %s246, 4
        %s248 = scalar_lea.vmem %s0, %s247
        %p249 = pneg %p55
        %p250 = pneg %p52
        %p251 = pneg %p76
        %p252 = pneg %p73
        %p253 = pneg %p97
        %p254 = pneg %p94
        %p255 = pneg %p118
        %p256 = pneg %p115
        %p257 = pneg %p139
        %p258 = pneg %p136
        %p259 = pneg %p160
        %p260 = pneg %p157
        %p261 = pneg %p186
        %p262 = pneg %p183
        %s263 = sand.u32 %s173, 1
        %s264 = scalar_lea.sflag [#allocation3], %s263
        %s265 = sand.u32 %s173, 1
        %s266 = scalar_lea.vmem [#allocation2], %s265
        %s267 = smul.u32 2, %s25
        %p268 = scmp.lt.s32.totalorder %s24, 1
        %s269 = scalar_select %p268, %s24, 1
        %p270 = scmp.lt.s32.totalorder %s267, 1
        %s271 = scalar_select %p270, %s267, 1
        %s272 = smul.addr %s269, 2
        %s273 = sadd.s32 %s271, %s272
        %s274 = smul.addr %s273, 4
        %s275 = scalar_lea.vmem %s0, %s274
        %s276 = smul.u32 2, %s25
        %p277 = scmp.eq.s32.totalorder %s25, 0
        // Predicated region
        $region45: #{tpu_custom_call.1} parent=43 // pred_check
          %p278 = pneg %p277
        $region46: #{tpu_custom_call.1} parent=43 // pred_check_branch
          %280 = sbr.rel (%p278) target = $region48
        $region47: #{tpu_custom_call.1} parent=43 // pred_region
          %281 = vst [vmem:[%s266] sm:$0x1] 0.0
        $region48: #{tpu_custom_call.1} parent=43 // pred_fallthru
          _
        %v282 = vld [vmem:[%s275] sm:$0xff]
        %v283 = vld [vmem:[%s266] sm:$0x1]
        %v284 = vld [vmem:[%s1] sm:$0xff]
        %v285 = vld [vmem:[%s1 + $0x8] sm:$0xff]
        %v286 = vld [vmem:[%s1 + $0x10] sm:$0xff]
        %v287 = vld [vmem:[%s1 + $0x18] sm:$0xff]
        %v288 = vld [vmem:[%s1 + $0x20] sm:$0xff]
        %v289 = vld [vmem:[%s1 + $0x28] sm:$0xff]
        %v290 = vld [vmem:[%s1 + $0x30] sm:$0xff]
        %v291 = vld [vmem:[%s1 + $0x38] sm:$0xff]
        %v292 = vld [vmem:[%s1 + $0x40] sm:$0xff]
        %v293 = vld [vmem:[%s1 + $0x48] sm:$0xff]
        %v294 = vld [vmem:[%s1 + $0x50] sm:$0xff]
        %v295 = vld [vmem:[%s1 + $0x58] sm:$0xff]
        %v296 = vld [vmem:[%s1 + $0x60] sm:$0xff]
        %v297 = vld [vmem:[%s1 + $0x68] sm:$0xff]
        %v298 = vld [vmem:[%s1 + $0x70] sm:$0xff]
        %v299 = vld [vmem:[%s1 + $0x78] sm:$0xff]
        %301 = vst [vmem:[#allocation1] ss:$2 sm:$0xff] %v282
        %v302 = vld.sshfl [vmem:[#allocation1] sm:$0xff pattern:$0x75316420]
        %v303 = vld.sshfl [vmem:[#allocation1 + $0x8] sm:$0xff pattern:$0x75316420]
        %vm304 = vcmask 31744
        %v306 = vsel %vm304, %v284, 0
        %v309 = vsel %vm304, %v285, 0
        %v312 = vsel %vm304, %v286, 0
        %v315 = vsel %vm304, %v287, 0
        %v318 = vsel %vm304, %v288, 0
        %v321 = vsel %vm304, %v289, 0
        %v324 = vsel %vm304, %v290, 0
        %v327 = vsel %vm304, %v291, 0
        %v330 = vsel %vm304, %v292, 0
        %v333 = vsel %vm304, %v293, 0
        %v336 = vsel %vm304, %v294, 0
        %v339 = vsel %vm304, %v295, 0
        %v342 = vsel %vm304, %v296, 0
        %v345 = vsel %vm304, %v297, 0
        %v348 = vsel %vm304, %v298, 0
        %v351 = vsel %vm304, %v299, 0
        %vm353 = vcmask 1043456
        %v354 = vsel %vm353, %v302, 0
        %v356 = vsel %vm353, %v303, 0
        %358 = vmatpush.msra.mxu0 0.0
        %359 = vmatpush.msra.mxu0 0.0
        %360 = vmatpush.msra.mxu0 0.0
        %361 = vmatpush.msra.mxu0 0.0
        %362 = vmatpush.msra.mxu0 0.0
        %363 = vmatpush.msra.mxu0 0.0
        %364 = vmatpush.msra.mxu0 0.0
        %365 = vmatpush.msra.mxu0 0.0
        %366 = vmatpush.msra.mxu0 0.0
        %367 = vmatpush.msra.mxu0 0.0
        %368 = vmatpush.msra.mxu0 0.0
        %369 = vmatpush.msra.mxu0 0.0
        %370 = vmatpush.msra.mxu0 0.0
        %371 = vmatpush.msra.mxu0 0.0
        %372 = vmatpush.msra.mxu0 0.0
        %373 = vmatpush.msra.mxu0 %v354
        %374 = vmatmul.f32.gmra.mxu0 %v306
        %v375 = vpop.f32.mrf.mxu0
        %v376 = vadd.f32 0.0, %v375
        %377 = vmatmul.f32.gmra.mxu0 %v309
        %v378 = vpop.f32.mrf.mxu0
        %v379 = vadd.f32 0.0, %v378
        %380 = vmatmul.f32.gmra.mxu0 %v312
        %v381 = vpop.f32.mrf.mxu0
        %v382 = vadd.f32 0.0, %v381
        %383 = vmatmul.f32.gmra.mxu0 %v315
        %v384 = vpop.f32.mrf.mxu0
        %v385 = vadd.f32 0.0, %v384
        %386 = vmatmul.f32.gmra.mxu0 %v318
        %v387 = vpop.f32.mrf.mxu0
        %v388 = vadd.f32 0.0, %v387
        %389 = vmatmul.f32.gmra.mxu0 %v321
        %v390 = vpop.f32.mrf.mxu0
        %v391 = vadd.f32 0.0, %v390
        %392 = vmatmul.f32.gmra.mxu0 %v324
        %v393 = vpop.f32.mrf.mxu0
        %v394 = vadd.f32 0.0, %v393
        %395 = vmatmul.f32.gmra.mxu0 %v327
        %v396 = vpop.f32.mrf.mxu0
        %v397 = vadd.f32 0.0, %v396
        %398 = vmatmul.f32.gmra.mxu0 %v330
        %v399 = vpop.f32.mrf.mxu0
        %v400 = vadd.f32 0.0, %v399
        %401 = vmatmul.f32.gmra.mxu0 %v333
        %v402 = vpop.f32.mrf.mxu0
        %v403 = vadd.f32 0.0, %v402
        %404 = vmatmul.f32.gmra.mxu0 %v336
        %v405 = vpop.f32.mrf.mxu0
        %v406 = vadd.f32 0.0, %v405
        %407 = vmatmul.f32.gmra.mxu0 %v339
        %v408 = vpop.f32.mrf.mxu0
        %v409 = vadd.f32 0.0, %v408
        %410 = vmatmul.f32.gmra.mxu0 %v342
        %v411 = vpop.f32.mrf.mxu0
        %v412 = vadd.f32 0.0, %v411
        %413 = vmatmul.f32.gmra.mxu0 %v345
        %v414 = vpop.f32.mrf.mxu0
        %v415 = vadd.f32 0.0, %v414
        %416 = vmatmul.f32.gmra.mxu0 %v348
        %v417 = vpop.f32.mrf.mxu0
        %v418 = vadd.f32 0.0, %v417
        %419 = vmatmul.f32.gmra.mxu0 %v351
        %v420 = vpop.f32.mrf.mxu0
        %v421 = vadd.f32 0.0, %v420
        %422 = vdwg.mxu0
        %423 = vmatpush.msra.mxu0 0.0
        %424 = vmatpush.msra.mxu0 0.0
        %425 = vmatpush.msra.mxu0 0.0
        %426 = vmatpush.msra.mxu0 0.0
        %427 = vmatpush.msra.mxu0 0.0
        %428 = vmatpush.msra.mxu0 0.0
        %429 = vmatpush.msra.mxu0 0.0
        %430 = vmatpush.msra.mxu0 0.0
        %431 = vmatpush.msra.mxu0 0.0
        %432 = vmatpush.msra.mxu0 0.0
        %433 = vmatpush.msra.mxu0 0.0
        %434 = vmatpush.msra.mxu0 0.0
        %435 = vmatpush.msra.mxu0 0.0
        %436 = vmatpush.msra.mxu0 0.0
        %437 = vmatpush.msra.mxu0 0.0
        %438 = vmatpush.msra.mxu0 %v356
        %439 = vmatmul.f32.gmra.mxu0 %v306
        %v440 = vpop.f32.mrf.mxu0
        %v441 = vadd.f32 0.0, %v440
        %442 = vmatmul.f32.gmra.mxu0 %v309
        %v443 = vpop.f32.mrf.mxu0
        %v444 = vadd.f32 0.0, %v443
        %445 = vmatmul.f32.gmra.mxu0 %v312
        %v446 = vpop.f32.mrf.mxu0
        %v447 = vadd.f32 0.0, %v446
        %448 = vmatmul.f32.gmra.mxu0 %v315
        %v449 = vpop.f32.mrf.mxu0
        %v450 = vadd.f32 0.0, %v449
        %451 = vmatmul.f32.gmra.mxu0 %v318
        %v452 = vpop.f32.mrf.mxu0
        %v453 = vadd.f32 0.0, %v452
        %454 = vmatmul.f32.gmra.mxu0 %v321
        %v455 = vpop.f32.mrf.mxu0
        %v456 = vadd.f32 0.0, %v455
        %457 = vmatmul.f32.gmra.mxu0 %v324
        %v458 = vpop.f32.mrf.mxu0
        %v459 = vadd.f32 0.0, %v458
        %460 = vmatmul.f32.gmra.mxu0 %v327
        %v461 = vpop.f32.mrf.mxu0
        %v462 = vadd.f32 0.0, %v461
        %463 = vmatmul.f32.gmra.mxu0 %v330
        %v464 = vpop.f32.mrf.mxu0
        %v465 = vadd.f32 0.0, %v464
        %466 = vmatmul.f32.gmra.mxu0 %v333
        %v467 = vpop.f32.mrf.mxu0
        %v468 = vadd.f32 0.0, %v467
        %469 = vmatmul.f32.gmra.mxu0 %v336
        %v470 = vpop.f32.mrf.mxu0
        %v471 = vadd.f32 0.0, %v470
        %472 = vmatmul.f32.gmra.mxu0 %v339
        %v473 = vpop.f32.mrf.mxu0
        %v474 = vadd.f32 0.0, %v473
        %475 = vmatmul.f32.gmra.mxu0 %v342
        %v476 = vpop.f32.mrf.mxu0
        %v477 = vadd.f32 0.0, %v476
        %478 = vmatmul.f32.gmra.mxu0 %v345
        %v479 = vpop.f32.mrf.mxu0
        %v480 = vadd.f32 0.0, %v479
        %481 = vmatmul.f32.gmra.mxu0 %v348
        %v482 = vpop.f32.mrf.mxu0
        %v483 = vadd.f32 0.0, %v482
        %484 = vmatmul.f32.gmra.mxu0 %v351
        %v485 = vpop.f32.mrf.mxu0
        %v486 = vadd.f32 0.0, %v485
        %487 = vdwg.mxu0
        %v488 = vmax.f32 %v376, 0.0
        %v489 = vmax.f32 %v441, 0.0
        %v490 = vmax.f32 %v379, 0.0
        %v491 = vmax.f32 %v444, 0.0
        %v492 = vmax.f32 %v382, 0.0
        %v493 = vmax.f32 %v447, 0.0
        %v494 = vmax.f32 %v385, 0.0
        %v495 = vmax.f32 %v450, 0.0
        %v496 = vmax.f32 %v388, 0.0
        %v497 = vmax.f32 %v453, 0.0
        %v498 = vmax.f32 %v391, 0.0
        %v499 = vmax.f32 %v456, 0.0
        %v500 = vmax.f32 %v394, 0.0
        %v501 = vmax.f32 %v459, 0.0
        %v502 = vmax.f32 %v397, 0.0
        %v503 = vmax.f32 %v462, 0.0
        %v504 = vmax.f32 %v400, 0.0
        %v505 = vmax.f32 %v465, 0.0
        %v506 = vmax.f32 %v403, 0.0
        %v507 = vmax.f32 %v468, 0.0
        %v508 = vmax.f32 %v406, 0.0
        %v509 = vmax.f32 %v471, 0.0
        %v510 = vmax.f32 %v409, 0.0
        %v511 = vmax.f32 %v474, 0.0
        %v512 = vmax.f32 %v412, 0.0
        %v513 = vmax.f32 %v477, 0.0
        %v514 = vmax.f32 %v415, 0.0
        %v515 = vmax.f32 %v480, 0.0
        %v516 = vmax.f32 %v418, 0.0
        %v517 = vmax.f32 %v483, 0.0
        %v518 = vmax.f32 %v421, 0.0
        %v519 = vmax.f32 %v486, 0.0
        %520 = vmatpush.xpose.msra.mxu0 %v518
        %521 = vmatpush.xpose.msra.mxu0 %v516
        %522 = vmatpush.xpose.msra.mxu0 %v514
        %523 = vmatpush.xpose.msra.mxu0 %v512
        %524 = vmatpush.xpose.msra.mxu0 %v510
        %525 = vmatpush.xpose.msra.mxu0 %v508
        %526 = vmatpush.xpose.msra.mxu0 %v506
        %527 = vmatpush.xpose.msra.mxu0 %v504
        %528 = vmatpush.xpose.msra.mxu0 %v502
        %529 = vmatpush.xpose.msra.mxu0 %v500
        %530 = vmatpush.xpose.msra.mxu0 %v498
        %531 = vmatpush.xpose.msra.mxu0 %v496
        %532 = vmatpush.xpose.msra.mxu0 %v494
        %533 = vmatpush.xpose.msra.mxu0 %v492
        %534 = vmatpush.xpose.msra.mxu0 %v490
        %535 = vmatpush.xpose.msra.mxu0 %v488
        %536 = vmatmul.f32.gmra.mxu0 1.0
        %v537 = vpop.f32.mrf.mxu0
        %v538 = vadd.f32 0.0, %v537
        %539 = vdwg.mxu0
        %540 = vmatpush.xpose.msra.mxu0 %v519
        %541 = vmatpush.xpose.msra.mxu0 %v517
        %542 = vmatpush.xpose.msra.mxu0 %v515
        %543 = vmatpush.xpose.msra.mxu0 %v513
        %544 = vmatpush.xpose.msra.mxu0 %v511
        %545 = vmatpush.xpose.msra.mxu0 %v509
        %546 = vmatpush.xpose.msra.mxu0 %v507
        %547 = vmatpush.xpose.msra.mxu0 %v505
        %548 = vmatpush.xpose.msra.mxu0 %v503
        %549 = vmatpush.xpose.msra.mxu0 %v501
        %550 = vmatpush.xpose.msra.mxu0 %v499
        %551 = vmatpush.xpose.msra.mxu0 %v497
        %552 = vmatpush.xpose.msra.mxu0 %v495
        %553 = vmatpush.xpose.msra.mxu0 %v493
        %554 = vmatpush.xpose.msra.mxu0 %v491
        %555 = vmatpush.xpose.msra.mxu0 %v489
        %556 = vmatmul.f32.gmra.mxu0 1.0
        %v557 = vpop.f32.mrf.mxu0
        %v558 = vadd.f32 %v538, %v557
        %559 = vdwg.mxu0
        %v560 = vadd.f32 %v283, %v558
        %561 = vst [vmem:[%s266] sm:$0x1] %v560
        // Predicated region
        $region49: #{tpu_custom_call.1} parent=43 // pred_check
          %p562 = pneg %p277
        $region50: #{tpu_custom_call.1} parent=43 // pred_check_branch
          %564 = sbr.rel (%p562) target = $region52
        $region51: #{tpu_custom_call.1} parent=43 // pred_region
          %v565 = vld [vmem:[%s266] sm:$0x1]
          %v566 = vmul.f32 %v565, 0.00390625
          %v567 = vld [vmem:[%s5] sm:$0x1]
          %v568 = vadd.f32 %v567, 1e-05
          %v569 = vrsqrt.pop %v568
          %v570 = vmul.f32 %v569, %v568
          %v571 = vmul.f32 %v570, %v569
          %v572 = vmul.f32 0.5, %v571
          %v573 = vsub.f32 1.5, %v572
          %v574 = vmul.f32 %v569, %v573
          %vm575 = vweird.f32 %v568
          %vm576 = vweird.f32 %v569
          %vm577 = vmor %vm575, %vm576
          %v578 = vsel %vm577, %v569, %v574
          %v579 = vld [vmem:[%s4] sm:$0x1]
          %v580 = vsub.f32 %v566, %v579
          %v581 = vmul.f32 %v580, %v578
          %v582 = vld [vmem:[%s2] sm:$0x1]
          %v583 = vmul.f32 %v581, %v582
          %v584 = vld [vmem:[%s3] sm:$0x1]
          %v585 = vadd.f32 %v583, %v584
          %586 = vst [vmem:[%s266] sm:$0x1] %v585
        $region52: #{tpu_custom_call.1} parent=43 // pred_fallthru
          _
        %s587 = sand.u32 %s173, 1
        %s588 = scalar_lea.sflag [#allocation3], %s587
        %s589 = sand.u32 %s173, 1
        %s590 = scalar_lea.vmem [#allocation2], %s589
        // Predicated region
        $region53: #{tpu_custom_call.1} parent=43 // pred_check
          %p591 = pneg %p183
        $region54: #{tpu_custom_call.1} parent=43 // pred_check_branch
          %593 = sbr.rel (%p591) target = $region56
        $region55: #{tpu_custom_call.1} parent=43 // pred_region
          %595 = vsyncadd %s588, 0
          %s596 = scalar_lea.hbm %s6, %s24
          %s598 = sshll.u32 %s590, 4
          %s599 = int_to_ptr.vmem [resolvable:$true] %s598
          %s600 = sshll.u32 %s596, 4
          %s601 = int_to_ptr.hbm [resolvable:$true] %s600
          %603 = dma.vmem_to_hbm [thread:$0]  %s599, 16, %s601, %s588
        $region56: #{tpu_custom_call.1} parent=43 // pred_fallthru
          _
      $region44: #{tpu_custom_call.1} parent=5 // pred_fallthru
        _
      %p604 = scmp.le.s32.totalorder 2, %s15
      // Predicated region
      $region57: #{tpu_custom_call.1} parent=5 // pred_check
        %p605 = pneg %p604
      $region58: #{tpu_custom_call.1} parent=5 // pred_check_branch
        %607 = sbr.rel (%p605) target = $region60
      $region59: #{tpu_custom_call.1} parent=5 // pred_region
        %s608 = ssub.s32 %s15, 2
        // Predicated region
        $region61: #{tpu_custom_call.1} parent=59 // pred_check
          %p609 = pneg %p189
        $region62: #{tpu_custom_call.1} parent=59 // pred_check_branch
          %611 = sbr.rel (%p609) target = $region64
        $region63: #{tpu_custom_call.1} parent=59 // pred_region
          %s612 = sand.u32 %s174, 1
          %s613 = scalar_lea.sflag [#allocation3], %s612
          %s614 = sand.u32 %s174, 1
          %s615 = scalar_lea.vmem [#allocation2], %s614
          %617 = dma.done %s613, 16
        $region64: #{tpu_custom_call.1} parent=59 // pred_fallthru
          _
      $region60: #{tpu_custom_call.1} parent=5 // pred_fallthru
        _
    $region6: #{tpu_custom_call.1} parent=1 // loop_footer
      %s19 = sadd.s32 1, %s15
    $region7: #{tpu_custom_call.1} parent=1 // loop_footer_branch
      %14 = sbr.rel target = $region3
    $region8: #{tpu_custom_call.1} parent=1 // loop_exit
      _
    %618 = vsyncpa [#allocation3], 1
    %s619 = scalar_lea.sflag [#allocation3], 1
    %620 = vsyncpa %s619, 1

</llo_original>
